<compile_context>
chip_gen: v5e
topology: v5e:2x2
jax: 0.10.0
libtpu: 0.0.40
codegen_flags: <defaults>
</compile_context>

<pallas_src>
import jax
import jax.numpy as jnp
from jax import lax
from jax.experimental import pallas as pl
from jax.experimental.pallas import tpu as pltpu

# ----- config: small shapes consistent with the module -----
DIM = 64                    # C (input channels)
H = 8
W = 8
BATCH = 2
C4 = 4 * DIM                # 256  (LayerNorm width, multiple of 128)
C2 = 2 * DIM                # 128  (reduction output width, lane-dense)
L = (H // 2) * (W // 2)     # 16 merged tokens per image
LN_EPS = 1e-5


# ------------------------------------------------------------------ kernel --
def _patch_merging_kernel(x_ref, b_ref, w_ref, o_ref):
    """Fused LayerNorm(4C) + Linear(4C -> 2C) for all B*L rows at once.

    x_ref: (B*L, 4C) f32   merged tokens
    b_ref: (1,   2C) f32   folded bias   (beta @ W^T)
    w_ref: (4C,  2C) bf16  folded weight (gamma[:, None] * W^T)
    o_ref: (B*L, 2C) f32
    """
    x = x_ref[...]                                            # (BL, 4C) f32
    # One-pass LN stats: mean and mean-of-squares are independent reductions.
    mu = jnp.mean(x, axis=1, keepdims=True)
    msq = jnp.mean(x * x, axis=1, keepdims=True)
    var = jnp.maximum(msq - mu * mu, 0.0)                     # clamp >= 0
    xn = ((x - mu) * lax.rsqrt(var + LN_EPS)).astype(jnp.bfloat16)
    o_ref[...] = (
        jnp.dot(xn, w_ref[...], preferred_element_type=jnp.float32)
        + b_ref[...]
    )


# ------------------------------------------------------------------ wrapper --
def _space_to_depth(x):
    """(B, H, W, C) -> (B, (H//2)*(W//2), 4C); torch concat order [x0, x1, x2, x3]."""
    x0 = x[:, 0::2, 0::2, :]
    x1 = x[:, 1::2, 0::2, :]
    x2 = x[:, 0::2, 1::2, :]
    x3 = x[:, 1::2, 1::2, :]
    m = jnp.concatenate([x0, x1, x2, x3], axis=-1)
    b = x.shape[0]
    return m.reshape(b, -1, 4 * x.shape[-1])


@jax.jit
def patch_merging_pallas(x, gamma, beta, w_red_t):
    b, h, w, c = x.shape
    c4 = 4 * c
    c2 = 2 * c
    l = (h // 2) * (w // 2)

    # Space-to-depth, then fold the batch into the row dimension -> (B*L, 4C).
    merged = _space_to_depth(x).astype(jnp.float32).reshape(b * l, c4)

    # Fold the LayerNorm affine into the reduction weight / bias (trace-time
    # constant folding; free on the critical path).
    gamma_f = gamma.reshape(c4).astype(jnp.float32)
    beta_f = beta.reshape(1, c4).astype(jnp.float32)
    w_t_f = w_red_t.astype(jnp.float32)
    w_prime = (gamma_f[:, None] * w_t_f).astype(jnp.bfloat16)        # (4C, 2C) bf16
    bias_prime = jnp.dot(beta_f, w_t_f,
                         precision=lax.Precision.HIGHEST)            # (1, 2C) f32

    vmem = pl.BlockSpec(memory_space=pltpu.MemorySpace.VMEM)
    out = pl.pallas_call(
        _patch_merging_kernel,
        out_shape=jax.ShapeDtypeStruct((b * l, c2), jnp.float32),
        in_specs=[vmem, vmem, vmem],      # whole arrays in VMEM, single step
        out_specs=vmem,
        compiler_params=pltpu.CompilerParams(
            # Let XLA fuse the space-to-depth producer into the input DMA of
            # the merged-token operand (avoids materializing it in HBM).
            allow_input_fusion=[True, False, False],
        ),
    )(merged, bias_prime, w_prime)
    return out.reshape(b, l, c2)


# ------------------------------------------------------- pure-JAX reference --
@jax.jit
def patch_merging_ref(x, gamma, beta, w_red_t):
    merged = _space_to_depth(x).astype(jnp.float32)
    mu = jnp.mean(merged, axis=-1, keepdims=True)
    var = jnp.mean(jnp.square(merged - mu), axis=-1, keepdims=True)
    xn = (merged - mu) * lax.rsqrt(var + LN_EPS) * gamma + beta
    return jnp.matmul(xn, w_red_t, precision=lax.Precision.HIGHEST)


# -------------------------------------------------------------------- main --
if __name__ == "__main__":
    key = jax.random.PRNGKey(0)
    kx, kg, kb, kw = jax.random.split(key, 4)

    x = jax.random.normal(kx, (BATCH, H, W, DIM), jnp.float32)
    gamma = 1.0 + 0.1 * jax.random.normal(kg, (1, C4), jnp.float32)   # LN weight
    beta = 0.05 * jax.random.normal(kb, (1, C4), jnp.float32)         # LN bias
    # torch nn.Linear(4*dim, 2*dim, bias=False).weight has shape (2C, 4C);
    # pass it pre-transposed as (4C, 2C) so the kernel does xn @ W^T.
    w_red = jax.random.normal(kw, (C2, C4), jnp.float32) / jnp.sqrt(jnp.float32(C4))
    w_red_t = jnp.asarray(w_red.T)

    out = patch_merging_pallas(x, gamma, beta, w_red_t)
    out = jax.block_until_ready(out)
    assert out.shape == (BATCH, L, C2), out.shape

    ref = patch_merging_ref(x, gamma, beta, w_red_t)
    err = float(jnp.max(jnp.abs(out - ref)))
    if not (err < 3e-2) or not bool(jnp.all(jnp.isfinite(out))):
        raise RuntimeError(f"mismatch vs pure-JAX reference: max abs err = {err}")

    print("KERNEL_OK")
</pallas_src>

<mosaic_0001>
module attributes {stable_mosaic.version = 11 : i64} {
  func.func @_patch_merging_kernel(%arg0: memref<32x256xf32, #tpu.memory_space<vmem>>, %arg1: memref<1x128xf32, #tpu.memory_space<vmem>>, %arg2: memref<256x128xbf16, #tpu.memory_space<vmem>>, %arg3: memref<32x128xf32, #tpu.memory_space<vmem>>) attributes {dimension_semantics = [], scalar_prefetch = 0 : i64, scratch_operands = 0 : i64, tpu.core_type = #tpu.core_type<tc>} {
    %c0 = arith.constant 0 : index
    %c0_0 = arith.constant 0 : index
    %0 = vector.load %arg0[%c0, %c0_0] : memref<32x256xf32, #tpu.memory_space<vmem>>, vector<32x256xf32>
    %cst = arith.constant dense<0.000000e+00> : vector<32xf32>
    %1 = vector.multi_reduction <add>, %0, %cst [1] : vector<32x256xf32> to vector<32xf32>
    %2 = vector.shape_cast %1 : vector<32xf32> to vector<32x1xf32>
    %cst_1 = arith.constant 2.560000e+02 : f32
    %3 = vector.broadcast %cst_1 : f32 to vector<32x1xf32>
    %4 = arith.divf %2, %3 : vector<32x1xf32>
    %5 = arith.mulf %0, %0 : vector<32x256xf32>
    %cst_2 = arith.constant dense<0.000000e+00> : vector<32xf32>
    %6 = vector.multi_reduction <add>, %5, %cst_2 [1] : vector<32x256xf32> to vector<32xf32>
    %7 = vector.shape_cast %6 : vector<32xf32> to vector<32x1xf32>
    %cst_3 = arith.constant 2.560000e+02 : f32
    %8 = vector.broadcast %cst_3 : f32 to vector<32x1xf32>
    %9 = arith.divf %7, %8 : vector<32x1xf32>
    %10 = arith.mulf %4, %4 : vector<32x1xf32>
    %11 = arith.subf %9, %10 : vector<32x1xf32>
    %cst_4 = arith.constant 0.000000e+00 : f32
    %12 = vector.broadcast %cst_4 : f32 to vector<32x1xf32>
    %13 = arith.maximumf %11, %12 : vector<32x1xf32>
    %14 = vector.broadcast %4 : vector<32x1xf32> to vector<32x256xf32>
    %15 = arith.subf %0, %14 : vector<32x256xf32>
    %cst_5 = arith.constant 9.99999974E-6 : f32
    %16 = vector.broadcast %cst_5 : f32 to vector<32x1xf32>
    %17 = arith.addf %13, %16 : vector<32x1xf32>
    %18 = math.rsqrt %17 : vector<32x1xf32>
    %19 = vector.broadcast %18 : vector<32x1xf32> to vector<32x256xf32>
    %20 = arith.mulf %15, %19 : vector<32x256xf32>
    %21 = arith.truncf %20 : vector<32x256xf32> to vector<32x256xbf16>
    %c0_6 = arith.constant 0 : index
    %c0_7 = arith.constant 0 : index
    %22 = vector.load %arg2[%c0_6, %c0_7] : memref<256x128xbf16, #tpu.memory_space<vmem>>, vector<256x128xbf16>
    %cst_8 = arith.constant dense<0.000000e+00> : vector<32x128xf32>
    %23 = tpu.matmul %21, %22, %cst_8 {dimension_numbers = #tpu.dot_dimension_numbers<[1], [0], [0], [1], [0, 0, 1, 1], [], []>} : vector<32x256xbf16>, vector<256x128xbf16>, vector<32x128xf32> -> vector<32x128xf32>
    %c0_9 = arith.constant 0 : index
    %c0_10 = arith.constant 0 : index
    %24 = vector.load %arg1[%c0_9, %c0_10] : memref<1x128xf32, #tpu.memory_space<vmem>>, vector<1x128xf32>
    %25 = vector.broadcast %24 : vector<1x128xf32> to vector<32x128xf32>
    %26 = arith.addf %23, %25 : vector<32x128xf32>
    %c0_11 = arith.constant 0 : index
    %c0_12 = arith.constant 0 : index
    %27 = vector.load %arg3[%c0_11, %c0_12] : memref<32x128xf32, #tpu.memory_space<vmem>>, vector<32x128xf32>
    tpu.vector_store %arg3[%c0_11, %c0_12], %26 {strides = array<i32>} : memref<32x128xf32, #tpu.memory_space<vmem>>, vector<32x128xf32>,
    return
  }
}

</mosaic_0001>

<llo_original>
// kernel: patch_merging_pallas.1
$region0: #{patch_merging_pallas.1}
  #allocation0 [shape = 'u32[]', space=smem, size = 0x4, offset = 0x4, fixed_abs, tag = 'smem constant byte address 0x4 - core index']
  #allocation1 [shape = 'u32[72,128]{1,0:T(1,128)}', space=vmem, size = 0x9000, scoped, tag = 'internal scratch']
  %s0 = inlined_call_operand.vmem [shape: f32[32,256], index: 0, kind: input, shape index: {}]
  %s1 = inlined_call_operand.vmem [shape: f32[1,128], index: 1, kind: input, shape index: {}]
  %s2 = inlined_call_operand.vmem [shape: bf16[256,128], index: 2, kind: input, shape index: {}]
  %s3 = inlined_call_operand.hbm [shape: f32[32,128], index: 3, kind: output, shape index: {}]
  %s4 = sld [smem:[#allocation0]]
  $region22: #{patch_merging_pallas.1} parent=0
    _
  %s6 = ssub.s32 1, %s4
  %s7 = scalar_select 0, %s6, %s4
  $region1: #{patch_merging_pallas.1} parent=0
    #allocation2 [shape = 'u8[16384]{0}', space=vmem, size = 0x4000, scoped, tag = 'output window, operand 0, single buffered']
    #allocation3 [shape = 's32[1]{0}', space=sflag, size = 0x4, scoped, tag = 'scoped memory for patch_merging_pallas.1']
    %8 = vsyncpa [#allocation3], 0
    // Predicated region
    $region2: #{patch_merging_pallas.1} parent=1 // pred_check
      _
    $region3: #{patch_merging_pallas.1} parent=1 // pred_check_branch
      %10 = sbr.rel (0) target = $region5
    $region4: #{patch_merging_pallas.1} parent=1 // pred_region
      _
    $region5: #{patch_merging_pallas.1} parent=1 // pred_fallthru
      _
    // Predicated region
    $region6: #{patch_merging_pallas.1} parent=1 // pred_check
      _
    $region7: #{patch_merging_pallas.1} parent=1 // pred_check_branch
      %12 = sbr.rel (0) target = $region9
    $region8: #{patch_merging_pallas.1} parent=1 // pred_region
      _
    $region9: #{patch_merging_pallas.1} parent=1 // pred_fallthru
      _
    // Predicated region
    $region10: #{patch_merging_pallas.1} parent=1 // pred_check
      _
    $region11: #{patch_merging_pallas.1} parent=1 // pred_check_branch
      %14 = sbr.rel (0) target = $region13
    $region12: #{patch_merging_pallas.1} parent=1 // pred_region
      _
    $region13: #{patch_merging_pallas.1} parent=1 // pred_fallthru
      _
    %v15 = vld [vmem:[%s0] sm:$0xff]
    %v16 = vld [vmem:[%s0 + $0x8] sm:$0xff]
    %v17 = vld [vmem:[%s0 + $0x10] sm:$0xff]
    %v18 = vld [vmem:[%s0 + $0x18] sm:$0xff]
    %v19 = vld [vmem:[%s0 + $0x20] sm:$0xff]
    %v20 = vld [vmem:[%s0 + $0x28] sm:$0xff]
    %v21 = vld [vmem:[%s0 + $0x30] sm:$0xff]
    %v22 = vld [vmem:[%s0 + $0x38] sm:$0xff]
    %v23 = vadd.f32 %v15, %v16
    %24 = vadd.xlane.f32.xlu0 %v23
    %v25 = vpop.xlane.xlu0 %24
    %v26 = vadd.f32 %v17, %v18
    %27 = vadd.xlane.f32.xlu0 %v26
    %v28 = vpop.xlane.xlu0 %27
    %v29 = vadd.f32 %v19, %v20
    %30 = vadd.xlane.f32.xlu0 %v29
    %v31 = vpop.xlane.xlu0 %30
    %v32 = vadd.f32 %v21, %v22
    %33 = vadd.xlane.f32.xlu0 %v32
    %v34 = vpop.xlane.xlu0 %33
    %v35 = vrcp.pop 256.0
    %v36 = vmul.f32 256.0, %v35
    %v37 = vsub.f32 1.0, %v36
    %v38 = vmul.f32 %v35, %v37
    %v39 = vadd.f32 %v35, %v38
    %vm40 = vweird.f32 %v35
    %v41 = vsel %vm40, %v35, %v39
    %v42 = vmul.f32 %v25, %v41
    %v43 = vmul.f32 %v28, %v41
    %v44 = vmul.f32 %v31, %v41
    %v45 = vmul.f32 %v34, %v41
    %v46 = vmul.f32 %v15, %v15
    %v47 = vmul.f32 %v16, %v16
    %v48 = vmul.f32 %v17, %v17
    %v49 = vmul.f32 %v18, %v18
    %v50 = vmul.f32 %v19, %v19
    %v51 = vmul.f32 %v20, %v20
    %v52 = vmul.f32 %v21, %v21
    %v53 = vmul.f32 %v22, %v22
    %v54 = vadd.f32 %v46, %v47
    %55 = vadd.xlane.f32.xlu0 %v54
    %v56 = vpop.xlane.xlu0 %55
    %v57 = vadd.f32 %v48, %v49
    %58 = vadd.xlane.f32.xlu0 %v57
    %v59 = vpop.xlane.xlu0 %58
    %v60 = vadd.f32 %v50, %v51
    %61 = vadd.xlane.f32.xlu0 %v60
    %v62 = vpop.xlane.xlu0 %61
    %v63 = vadd.f32 %v52, %v53
    %64 = vadd.xlane.f32.xlu0 %v63
    %v65 = vpop.xlane.xlu0 %64
    %v66 = vmul.f32 %v56, %v41
    %v67 = vmul.f32 %v59, %v41
    %v68 = vmul.f32 %v62, %v41
    %v69 = vmul.f32 %v65, %v41
    %v70 = vmul.f32 %v42, %v42
    %v71 = vmul.f32 %v43, %v43
    %v72 = vmul.f32 %v44, %v44
    %v73 = vmul.f32 %v45, %v45
    %v74 = vsub.f32 %v66, %v70
    %v75 = vsub.f32 %v67, %v71
    %v76 = vsub.f32 %v68, %v72
    %v77 = vsub.f32 %v69, %v73
    %v78 = vmax.f32 %v74, 0.0
    %v79 = vmax.f32 %v75, 0.0
    %v80 = vmax.f32 %v76, 0.0
    %v81 = vmax.f32 %v77, 0.0
    %v82 = vsub.f32 %v15, %v42
    %v83 = vsub.f32 %v16, %v42
    %v84 = vsub.f32 %v17, %v43
    %v85 = vsub.f32 %v18, %v43
    %v86 = vsub.f32 %v19, %v44
    %v87 = vsub.f32 %v20, %v44
    %v88 = vsub.f32 %v21, %v45
    %v89 = vsub.f32 %v22, %v45
    %v90 = vadd.f32 %v78, 1e-05
    %v91 = vadd.f32 %v79, 1e-05
    %v92 = vadd.f32 %v80, 1e-05
    %v93 = vadd.f32 %v81, 1e-05
    %v94 = vrsqrt.pop %v90
    %v95 = vmul.f32 %v94, %v90
    %v96 = vmul.f32 %v95, %v94
    %v97 = vmul.f32 0.5, %v96
    %v98 = vsub.f32 1.5, %v97
    %v99 = vmul.f32 %v94, %v98
    %vm100 = vweird.f32 %v90
    %vm101 = vweird.f32 %v94
    %vm102 = vmor %vm100, %vm101
    %v103 = vsel %vm102, %v94, %v99
    %v104 = vrsqrt.pop %v91
    %v105 = vmul.f32 %v104, %v91
    %v106 = vmul.f32 %v105, %v104
    %v107 = vmul.f32 0.5, %v106
    %v108 = vsub.f32 1.5, %v107
    %v109 = vmul.f32 %v104, %v108
    %vm110 = vweird.f32 %v91
    %vm111 = vweird.f32 %v104
    %vm112 = vmor %vm110, %vm111
    %v113 = vsel %vm112, %v104, %v109
    %v114 = vrsqrt.pop %v92
    %v115 = vmul.f32 %v114, %v92
    %v116 = vmul.f32 %v115, %v114
    %v117 = vmul.f32 0.5, %v116
    %v118 = vsub.f32 1.5, %v117
    %v119 = vmul.f32 %v114, %v118
    %vm120 = vweird.f32 %v92
    %vm121 = vweird.f32 %v114
    %vm122 = vmor %vm120, %vm121
    %v123 = vsel %vm122, %v114, %v119
    %v124 = vrsqrt.pop %v93
    %v125 = vmul.f32 %v124, %v93
    %v126 = vmul.f32 %v125, %v124
    %v127 = vmul.f32 0.5, %v126
    %v128 = vsub.f32 1.5, %v127
    %v129 = vmul.f32 %v124, %v128
    %vm130 = vweird.f32 %v93
    %vm131 = vweird.f32 %v124
    %vm132 = vmor %vm130, %vm131
    %v133 = vsel %vm132, %v124, %v129
    %v134 = vmul.f32 %v82, %v103
    %v135 = vmul.f32 %v83, %v103
    %v136 = vmul.f32 %v84, %v113
    %v137 = vmul.f32 %v85, %v113
    %v138 = vmul.f32 %v86, %v123
    %v139 = vmul.f32 %v87, %v123
    %v140 = vmul.f32 %v88, %v133
    %v141 = vmul.f32 %v89, %v133
    %v142 = vpack.c.bf16 %v136, %v134
    %v143 = vpack.c.bf16 %v137, %v135
    %v144 = vpack.c.bf16 %v140, %v138
    %v145 = vpack.c.bf16 %v141, %v139
    %v146 = vld [vmem:[%s2] sm:$0xf]
    %v147 = vld [vmem:[%s2 + $0x4] sm:$0xf]
    %v148 = vld [vmem:[%s2 + $0x8] sm:$0xf]
    %v149 = vld [vmem:[%s2 + $0xc] sm:$0xf]
    %v150 = vld [vmem:[%s2 + $0x10] sm:$0xf]
    %v151 = vld [vmem:[%s2 + $0x14] sm:$0xf]
    %v152 = vld [vmem:[%s2 + $0x18] sm:$0xf]
    %v153 = vld [vmem:[%s2 + $0x1c] sm:$0xf]
    %v154 = vld [vmem:[%s2 + $0x20] sm:$0xf]
    %v155 = vld [vmem:[%s2 + $0x24] sm:$0xf]
    %v156 = vld [vmem:[%s2 + $0x28] sm:$0xf]
    %v157 = vld [vmem:[%s2 + $0x2c] sm:$0xf]
    %v158 = vld [vmem:[%s2 + $0x30] sm:$0xf]
    %v159 = vld [vmem:[%s2 + $0x34] sm:$0xf]
    %v160 = vld [vmem:[%s2 + $0x38] sm:$0xf]
    %v161 = vld [vmem:[%s2 + $0x3c] sm:$0xf]
    %v162 = vld [vmem:[%s2 + $0x40] sm:$0xf]
    %v163 = vld [vmem:[%s2 + $0x44] sm:$0xf]
    %v164 = vld [vmem:[%s2 + $0x48] sm:$0xf]
    %v165 = vld [vmem:[%s2 + $0x4c] sm:$0xf]
    %v166 = vld [vmem:[%s2 + $0x50] sm:$0xf]
    %v167 = vld [vmem:[%s2 + $0x54] sm:$0xf]
    %v168 = vld [vmem:[%s2 + $0x58] sm:$0xf]
    %v169 = vld [vmem:[%s2 + $0x5c] sm:$0xf]
    %v170 = vld [vmem:[%s2 + $0x60] sm:$0xf]
    %v171 = vld [vmem:[%s2 + $0x64] sm:$0xf]
    %v172 = vld [vmem:[%s2 + $0x68] sm:$0xf]
    %v173 = vld [vmem:[%s2 + $0x6c] sm:$0xf]
    %v174 = vld [vmem:[%s2 + $0x70] sm:$0xf]
    %v175 = vld [vmem:[%s2 + $0x74] sm:$0xf]
    %v176 = vld [vmem:[%s2 + $0x78] sm:$0xf]
    %v177 = vld [vmem:[%s2 + $0x7c] sm:$0xf]
    %v178 = vld [vmem:[%s1] sm:$0x1]
    %v180 = vperm.slane %v178, 0
    %v214 = vunpack.c.l.b16 %v146
    %v215 = vunpack.c.l.b16 %v147
    %v216 = vunpack.c.l.b16 %v148
    %v217 = vunpack.c.l.b16 %v149
    %v218 = vunpack.c.l.b16 %v150
    %v219 = vunpack.c.l.b16 %v151
    %v220 = vunpack.c.l.b16 %v152
    %v221 = vunpack.c.l.b16 %v153
    %v222 = vunpack.c.l.b16 %v154
    %v223 = vunpack.c.l.b16 %v155
    %v224 = vunpack.c.l.b16 %v156
    %v225 = vunpack.c.l.b16 %v157
    %v226 = vunpack.c.l.b16 %v158
    %v227 = vunpack.c.l.b16 %v159
    %v228 = vunpack.c.l.b16 %v160
    %v229 = vunpack.c.l.b16 %v161
    %v230 = vunpack.c.l.b16 %v162
    %v231 = vunpack.c.l.b16 %v163
    %v232 = vunpack.c.l.b16 %v164
    %v233 = vunpack.c.l.b16 %v165
    %v234 = vunpack.c.l.b16 %v166
    %v235 = vunpack.c.l.b16 %v167
    %v236 = vunpack.c.l.b16 %v168
    %v237 = vunpack.c.l.b16 %v169
    %v238 = vunpack.c.l.b16 %v170
    %v239 = vunpack.c.l.b16 %v171
    %v240 = vunpack.c.l.b16 %v172
    %v241 = vunpack.c.l.b16 %v173
    %v242 = vunpack.c.l.b16 %v174
    %v243 = vunpack.c.l.b16 %v175
    %v244 = vunpack.c.l.b16 %v176
    %v245 = vunpack.c.l.b16 %v177
    %v246 = vpack.c.b16 %v215, %v214
    %v247 = vpack.c.b16 %v217, %v216
    %v248 = vpack.c.b16 %v219, %v218
    %v249 = vpack.c.b16 %v221, %v220
    %v250 = vpack.c.b16 %v223, %v222
    %v251 = vpack.c.b16 %v225, %v224
    %v252 = vpack.c.b16 %v227, %v226
    %v253 = vpack.c.b16 %v229, %v228
    %v254 = vpack.c.b16 %v231, %v230
    %v255 = vpack.c.b16 %v233, %v232
    %v256 = vpack.c.b16 %v235, %v234
    %v257 = vpack.c.b16 %v237, %v236
    %v258 = vpack.c.b16 %v239, %v238
    %v259 = vpack.c.b16 %v241, %v240
    %v260 = vpack.c.b16 %v243, %v242
    %v261 = vpack.c.b16 %v245, %v244
    %278 = vmatpush.bf16.msra.mxu0 %v253
    %279 = vmatpush.bf16.msra.mxu0 %v252
    %280 = vmatpush.bf16.msra.mxu0 %v251
    %281 = vmatpush.bf16.msra.mxu0 %v250
    %282 = vmatpush.bf16.msra.mxu0 %v249
    %283 = vmatpush.bf16.msra.mxu0 %v248
    %284 = vmatpush.bf16.msra.mxu0 %v247
    %285 = vmatpush.bf16.msra.mxu0 %v246
    %286 = vmatmul.bf16.gmra.mxu0 %v142
    %v287 = vpop.f32.mrf.mxu0
    %v288 = vadd.f32 %v180, %v287
    %v289 = vpop.f32.mrf.mxu0
    %v290 = vadd.f32 %v180, %v289
    %291 = vmatmul.bf16.gmra.mxu0 %v144
    %v292 = vpop.f32.mrf.mxu0
    %v293 = vadd.f32 %v180, %v292
    %v294 = vpop.f32.mrf.mxu0
    %v295 = vadd.f32 %v180, %v294
    %296 = vdwg.mxu0
    %297 = vmatpush.bf16.msra.mxu0 %v261
    %298 = vmatpush.bf16.msra.mxu0 %v260
    %299 = vmatpush.bf16.msra.mxu0 %v259
    %300 = vmatpush.bf16.msra.mxu0 %v258
    %301 = vmatpush.bf16.msra.mxu0 %v257
    %302 = vmatpush.bf16.msra.mxu0 %v256
    %303 = vmatpush.bf16.msra.mxu0 %v255
    %304 = vmatpush.bf16.msra.mxu0 %v254
    %305 = vmatmul.bf16.gmra.mxu0 %v143
    %v306 = vpop.f32.mrf.mxu0
    %v307 = vadd.f32 %v288, %v306
    %v308 = vpop.f32.mrf.mxu0
    %v309 = vadd.f32 %v290, %v308
    %310 = vmatmul.bf16.gmra.mxu0 %v145
    %v311 = vpop.f32.mrf.mxu0
    %v312 = vadd.f32 %v293, %v311
    %v313 = vpop.f32.mrf.mxu0
    %v314 = vadd.f32 %v295, %v313
    %315 = vdwg.mxu0
    %316 = vst [vmem:[#allocation2] sm:$0xff] %v307
    %317 = vst [vmem:[#allocation2 + $0x8] sm:$0xff] %v309
    %318 = vst [vmem:[#allocation2 + $0x10] sm:$0xff] %v312
    %319 = vst [vmem:[#allocation2 + $0x18] sm:$0xff] %v314
    // Predicated region
    $region14: #{patch_merging_pallas.1} parent=1 // pred_check
      _
    $region15: #{patch_merging_pallas.1} parent=1 // pred_check_branch
      %321 = sbr.rel (0) target = $region17
    $region16: #{patch_merging_pallas.1} parent=1 // pred_region
      %323 = vsyncadd [#allocation3], 0
      %s324 = sshll.u32 [#allocation2], 4
      %s325 = int_to_ptr.vmem [resolvable:$true] %s324
      %s326 = sshll.u32 %s3, 4
      %s327 = int_to_ptr.hbm [resolvable:$true] %s326
      %332 = dma.vmem_to_hbm [thread:$0]  %s325, 512, %s327, [#allocation3], 128, 128, 8
    $region17: #{patch_merging_pallas.1} parent=1 // pred_fallthru
      _
    // Predicated region
    $region18: #{patch_merging_pallas.1} parent=1 // pred_check
      _
    $region19: #{patch_merging_pallas.1} parent=1 // pred_check_branch
      %334 = sbr.rel (0) target = $region21
    $region20: #{patch_merging_pallas.1} parent=1 // pred_region
      %336 = dma.done [#allocation3], 512
    $region21: #{patch_merging_pallas.1} parent=1 // pred_fallthru
      _
    %337 = vsyncpa [#allocation3], 1

</llo_original>
